<compile_context>
chip_gen: v6e
topology: v6e:2x2x1
jax: 0.10.0
libtpu: 0.0.40
codegen_flags: <defaults>
</compile_context>

<pallas_src>
import jax
import jax.numpy as jnp
from jax.experimental import pallas as pl
from jax.experimental.pallas import tpu as pltpu


def _round_up(x, m):
    return (x + m - 1) // m * m


# --------------------------------------------------------------------------
# Kernel 1: tiny SE-gate path, runs once per forward (grid-less pallas_call).
#   g = sigmoid(relu(s @ W1^T + b1) @ W2^T + b2)
# --------------------------------------------------------------------------
def se_gate_kernel(s_ref, w1_ref, b1_ref, w2_ref, b2_ref, g_ref):
    cdt = w1_ref.dtype                                       # bf16 compute dtype
    h = jnp.dot(s_ref[...], w1_ref[...],
                preferred_element_type=jnp.float32) + b1_ref[...]
    h = jnp.maximum(h, 0.0)
    z = jnp.dot(h.astype(cdt), w2_ref[...],
                preferred_element_type=jnp.float32) + b2_ref[...]
    g_ref[...] = jax.nn.sigmoid(z).astype(g_ref.dtype)


# --------------------------------------------------------------------------
# Kernel 2: hot path.  One Cout column tile of the final 1x1 conv per grid
# step.  x (bf16, HW x Cin) and g (bf16, 1 x Cin) are resident; the gating is
# a cheap per-step VPU broadcast-multiply fully hidden under the W3 DMA.
# --------------------------------------------------------------------------
def se_conv_out_kernel(g_ref, x_ref, w3_ref, o_ref):
    gx = x_ref[...] * g_ref[...]                              # bf16, broadcast rows
    o_ref[...] = jnp.dot(gx, w3_ref[...],
                         preferred_element_type=jnp.float32).astype(o_ref.dtype)


def prepare_params(w1, b1, w2, b2, w3, *, tn=512, compute_dtype=jnp.bfloat16):
    """One-time parameter prep (call at load time, NOT per forward):
    transpose 1x1-conv weights to (in, out), pad channel dims to 128-multiples,
    cast weights to the bf16 compute dtype.  PyTorch layouts expected:
    w1 [Cmid,Cin,1,1], w2 [Cin,Cmid,1,1], w3 [Cout,Cin,1,1]."""
    assert tn % 128 == 0
    cmid, cin = w1.shape[0], w1.shape[1]
    cout = w3.shape[0]
    cin_p = _round_up(cin, 128)
    cmid_p = _round_up(cmid, 128)
    cout_p = _round_up(cout, tn)

    def pad2(a, r, c):
        return jnp.pad(a, ((0, r - a.shape[0]), (0, c - a.shape[1])))

    w1t = pad2(w1.reshape(cmid, cin).T, cin_p, cmid_p).astype(compute_dtype)
    b1p = pad2(b1.reshape(1, cmid), 1, cmid_p).astype(jnp.float32)
    w2t = pad2(w2.reshape(cin, cmid).T, cmid_p, cin_p).astype(compute_dtype)
    b2p = pad2(b2.reshape(1, cin), 1, cin_p).astype(jnp.float32)
    w3t = pad2(w3.reshape(cout, cin).T, cin_p, cout_p).astype(compute_dtype)

    return dict(w1t=w1t, b1=b1p, w2t=w2t, b2=b2p, w3t=w3t,
                cin=cin, cmid=cmid, cout=cout,
                cin_p=cin_p, cmid_p=cmid_p, cout_p=cout_p,
                tn=tn, compute_dtype=compute_dtype)


def se_block(x271, x272, params):
    """x271: [1, Cin, H, W], x272: [1, Cin, 1, 1] (NCHW, like PyTorch)."""
    n, cin, hh, ww = x271.shape
    assert n == 1 and cin == params["cin"]
    hw = hh * ww
    hw_p = _round_up(hw, 8)
    cin_p = params["cin_p"]
    cout, cout_p, tn = params["cout"], params["cout_p"], params["tn"]
    cdt = params["compute_dtype"]

    # Channel-last activation matrices, zero-padded, bf16 (half the HBM bytes).
    x_mat = jnp.transpose(x271[0], (1, 2, 0)).reshape(hw, cin)
    x_mat = jnp.pad(x_mat, ((0, hw_p - hw), (0, cin_p - cin))).astype(cdt)
    s_vec = jnp.pad(x272.reshape(1, cin), ((0, 0), (0, cin_p - cin))).astype(cdt)

    # ---- gate kernel: runs once, everything fits in VMEM, no grid ----
    g = pl.pallas_call(
        se_gate_kernel,
        out_shape=jax.ShapeDtypeStruct((1, cin_p), cdt),
        compiler_params=pltpu.CompilerParams(
            vmem_limit_bytes=32 * 1024 * 1024),
    )(s_vec, params["w1t"], params["b1"], params["w2t"], params["b2"])

    # ---- hot kernel: stream W3 column tiles, gate + matmul per tile ----
    n_tiles = cout_p // tn
    itemsize_c = jnp.dtype(cdt).itemsize
    itemsize_o = jnp.dtype(x271.dtype).itemsize
    # Real working set (defaults double-buffer every operand) + headroom,
    # clamped so it never asks for v7x's entire 64 MiB but still overrides
    # v5e's 16 MiB default scoped limit.
    working_set = (2 * hw_p * cin_p * itemsize_c        # x (resident)
                   + 2 * cin_p * itemsize_c             # g (resident)
                   + 2 * cin_p * tn * itemsize_c        # W3 column tiles
                   + 2 * hw_p * tn * itemsize_o)        # output tiles
    vmem_limit = int(min(max(2 * working_set, 32 * 1024 * 1024),
                         48 * 1024 * 1024))

    out_mat = pl.pallas_call(
        se_conv_out_kernel,
        grid=(n_tiles,),
        in_specs=[
            pl.BlockSpec((1, cin_p), lambda j: (0, 0)),         # g   (resident)
            pl.BlockSpec((hw_p, cin_p), lambda j: (0, 0)),      # x   (resident)
            pl.BlockSpec((cin_p, tn), lambda j: (0, j)),        # W3^T column tile
        ],
        out_specs=pl.BlockSpec((hw_p, tn), lambda j: (0, j)),
        out_shape=jax.ShapeDtypeStruct((hw_p, cout_p), x271.dtype),
        compiler_params=pltpu.CompilerParams(
            # No carried state -> Cout tiles are independent -> megacore on v7x.
            dimension_semantics=("parallel",),
            vmem_limit_bytes=vmem_limit,
        ),
    )(g, x_mat, params["w3t"])

    out = out_mat[:hw, :cout].reshape(hh, ww, cout)
    return jnp.transpose(out, (2, 0, 1))[None]                # back to NCHW


# --------------------------------------------------------------------------
# References
# --------------------------------------------------------------------------
def reference_mixed(x271, x272, w1, b1, w2, b2, w3):
    """Mirrors the kernel's mixed-precision math exactly (bf16 operands,
    f32 accumulation, bf16 gate / gated activations)."""
    cin = x271.shape[1]
    cmid = w1.shape[0]
    cout = w3.shape[0]
    hh, ww = x271.shape[2], x271.shape[3]
    bf = jnp.bfloat16
    s = x272.reshape(1, cin).astype(bf)
    w1m = w1.reshape(cmid, cin).astype(bf)
    w2m = w2.reshape(cin, cmid).astype(bf)
    w3m = w3.reshape(cout, cin).astype(bf)
    h = jnp.maximum(jnp.dot(s, w1m.T, preferred_element_type=jnp.float32)
                    + b1[None, :], 0.0)
    g = jax.nn.sigmoid(jnp.dot(h.astype(bf), w2m.T,
                               preferred_element_type=jnp.float32)
                       + b2[None, :]).astype(bf)
    xm = jnp.transpose(x271[0], (1, 2, 0)).reshape(-1, cin).astype(bf)
    gx = xm * g
    om = jnp.dot(gx, w3m.T, preferred_element_type=jnp.float32)
    return jnp.transpose(om.reshape(hh, ww, cout), (2, 0, 1))[None].astype(x271.dtype)


def reference_f32(x271, x272, w1, b1, w2, b2, w3):
    """Pure-f32 reference of the PyTorch forward."""
    cin = x271.shape[1]
    cmid = w1.shape[0]
    cout = w3.shape[0]
    hh, ww = x271.shape[2], x271.shape[3]
    s = x272.reshape(1, cin)
    w1m = w1.reshape(cmid, cin)
    w2m = w2.reshape(cin, cmid)
    w3m = w3.reshape(cout, cin)
    h = jnp.maximum(jnp.dot(s, w1m.T) + b1[None, :], 0.0)
    g = jax.nn.sigmoid(jnp.dot(h, w2m.T) + b2[None, :])
    xm = jnp.transpose(x271[0], (1, 2, 0)).reshape(-1, cin)
    om = jnp.dot(xm * g, w3m.T)
    return jnp.transpose(om.reshape(hh, ww, cout), (2, 0, 1))[None].astype(x271.dtype)


if __name__ == "__main__":
    # Small shapes consistent with the module (original: Cin=Cout=2904,
    # Cmid=726, H=W=14; scaled down here).  tn=128 -> 3 Cout tiles, exercising
    # the grid and the resident x/g reuse across tiles.  Production calls use
    # the default tn=512.
    CIN, CMID, H, W = 384, 96, 14, 14
    COUT = CIN

    key = jax.random.PRNGKey(0)
    k = jax.random.split(key, 7)
    x271 = jax.random.normal(k[0], (1, CIN, H, W), dtype=jnp.float32)   # feature map
    x272 = jax.random.normal(k[1], (1, CIN, 1, 1), dtype=jnp.float32)   # squeezed vec

    # PyTorch Conv2d weight layouts, kernel 1x1.
    w1 = 0.1 * jax.random.normal(k[2], (CMID, CIN, 1, 1), dtype=jnp.float32)
    b1 = 0.1 * jax.random.normal(k[3], (CMID,), dtype=jnp.float32)
    w2 = 0.1 * jax.random.normal(k[4], (CIN, CMID, 1, 1), dtype=jnp.float32)
    b2 = 0.1 * jax.random.normal(k[5], (CIN,), dtype=jnp.float32)
    w3 = 0.1 * jax.random.normal(k[6], (COUT, CIN, 1, 1), dtype=jnp.float32)

    params = prepare_params(w1, b1, w2, b2, w3, tn=128)   # one-time prep
    out = jax.block_until_ready(se_block(x271, x272, params))
    assert out.shape == (1, COUT, H, W), out.shape

    # Tight check vs a reference using the same bf16-operand / f32-accumulate math.
    ref_mixed = reference_mixed(x271, x272, w1, b1, w2, b2, w3)
    err_mixed = float(jnp.max(jnp.abs(out - ref_mixed)))
    assert jnp.allclose(out, ref_mixed, atol=5e-3, rtol=5e-3), err_mixed

    # Loose check vs the pure-f32 PyTorch semantics (bf16 rounding tolerance).
    ref_f32 = reference_f32(x271, x272, w1, b1, w2, b2, w3)
    err_f32 = float(jnp.max(jnp.abs(out - ref_f32)))
    assert jnp.allclose(out, ref_f32, atol=8e-2, rtol=8e-2), err_f32

    print("KERNEL_OK")
</pallas_src>

<mosaic_0001>
module attributes {stable_mosaic.version = 11 : i64} {
  func.func @se_gate_kernel(%arg0: memref<1x384xbf16, #tpu.memory_space<vmem>>, %arg1: memref<384x128xbf16, #tpu.memory_space<vmem>>, %arg2: memref<1x128xf32, #tpu.memory_space<vmem>>, %arg3: memref<128x384xbf16, #tpu.memory_space<vmem>>, %arg4: memref<1x384xf32, #tpu.memory_space<vmem>>, %arg5: memref<1x384xbf16, #tpu.memory_space<vmem>>) attributes {dimension_semantics = [], scalar_prefetch = 0 : i64, scratch_operands = 0 : i64, tpu.core_type = #tpu.core_type<tc>} {
    %c0 = arith.constant 0 : index
    %c0_0 = arith.constant 0 : index
    %0 = vector.load %arg0[%c0, %c0_0] : memref<1x384xbf16, #tpu.memory_space<vmem>>, vector<1x384xbf16>
    %c0_1 = arith.constant 0 : index
    %c0_2 = arith.constant 0 : index
    %1 = vector.load %arg1[%c0_1, %c0_2] : memref<384x128xbf16, #tpu.memory_space<vmem>>, vector<384x128xbf16>
    %cst = arith.constant dense<0.000000e+00> : vector<1x128xf32>
    %2 = tpu.matmul %0, %1, %cst {dimension_numbers = #tpu.dot_dimension_numbers<[1], [0], [0], [1], [0, 0, 1, 1], [], []>} : vector<1x384xbf16>, vector<384x128xbf16>, vector<1x128xf32> -> vector<1x128xf32>
    %c0_3 = arith.constant 0 : index
    %c0_4 = arith.constant 0 : index
    %3 = vector.load %arg2[%c0_3, %c0_4] : memref<1x128xf32, #tpu.memory_space<vmem>>, vector<1x128xf32>
    %4 = arith.addf %2, %3 : vector<1x128xf32>
    %cst_5 = arith.constant 0.000000e+00 : f32
    %5 = vector.broadcast %cst_5 : f32 to vector<1x128xf32>
    %6 = arith.maximumf %4, %5 : vector<1x128xf32>
    %7 = arith.truncf %6 : vector<1x128xf32> to vector<1x128xbf16>
    %c0_6 = arith.constant 0 : index
    %c0_7 = arith.constant 0 : index
    %8 = vector.load %arg3[%c0_6, %c0_7] : memref<128x384xbf16, #tpu.memory_space<vmem>>, vector<128x384xbf16>
    %cst_8 = arith.constant dense<0.000000e+00> : vector<1x384xf32>
    %9 = tpu.matmul %7, %8, %cst_8 {dimension_numbers = #tpu.dot_dimension_numbers<[1], [0], [0], [1], [0, 0, 1, 1], [], []>} : vector<1x128xbf16>, vector<128x384xbf16>, vector<1x384xf32> -> vector<1x384xf32>
    %c0_9 = arith.constant 0 : index
    %c0_10 = arith.constant 0 : index
    %10 = vector.load %arg4[%c0_9, %c0_10] : memref<1x384xf32, #tpu.memory_space<vmem>>, vector<1x384xf32>
    %11 = arith.addf %9, %10 : vector<1x384xf32>
    %12 = arith.negf %11 : vector<1x384xf32>
    %13 = math.exp %12 : vector<1x384xf32>
    %cst_11 = arith.constant 1.000000e+00 : f32
    %14 = vector.broadcast %cst_11 : f32 to vector<1x384xf32>
    %15 = arith.addf %14, %13 : vector<1x384xf32>
    %16 = arith.divf %14, %15 : vector<1x384xf32>
    %17 = arith.truncf %16 : vector<1x384xf32> to vector<1x384xbf16>
    %c0_12 = arith.constant 0 : index
    %c0_13 = arith.constant 0 : index
    %18 = vector.load %arg5[%c0_12, %c0_13] : memref<1x384xbf16, #tpu.memory_space<vmem>>, vector<1x384xbf16>
    tpu.vector_store %arg5[%c0_12, %c0_13], %17 {strides = array<i32>} : memref<1x384xbf16, #tpu.memory_space<vmem>>, vector<1x384xbf16>,
    return
  }
}

</mosaic_0001>

<llo_original>
// kernel: tpu_custom_call.1
$region0: #{tpu_custom_call.1}
  #allocation0 [shape = 'u32[]', space=smem, size = 0x4, offset = 0x4, fixed_abs, tag = 'smem constant byte address 0x4 - core index']
  #allocation1 [shape = 'u32[144,128]{1,0:T(1,128)}', space=vmem, size = 0x12000, scoped, tag = 'internal scratch']
  %s0 = inlined_call_operand.hbm [shape: bf16[1,384], index: 0, kind: input, shape index: {}]
  %s1 = inlined_call_operand.hbm [shape: bf16[384,128], index: 1, kind: input, shape index: {}]
  %s2 = inlined_call_operand.vmem [shape: f32[1,128], index: 2, kind: input, shape index: {}]
  %s3 = inlined_call_operand.hbm [shape: bf16[128,384], index: 3, kind: input, shape index: {}]
  %s4 = inlined_call_operand.vmem [shape: f32[1,384], index: 4, kind: input, shape index: {}]
  %s5 = inlined_call_operand.hbm [shape: bf16[1,384], index: 5, kind: output, shape index: {}]
  %s6 = sld [smem:[#allocation0]]
  $region42: #{tpu_custom_call.1} parent=0
    _
  %s8 = ssub.s32 1, %s6
  %s9 = scalar_select 0, %s8, %s6
  $region1: #{tpu_custom_call.1} parent=0
    #allocation2 [shape = 'u8[1536]{0}', space=vmem, size = 0x800, scoped, tag = 'input window, operand 0, single buffered']
    #allocation3 [shape = 's32[1]{0}', space=sflag, size = 0x4, scoped, tag = 'scoped memory for tpu_custom_call.1']
    #allocation4 [shape = 's32[1]{0}', space=sflag, size = 0x4, scoped, tag = 'scoped memory for tpu_custom_call.1']
    #allocation5 [shape = 'u8[98304]{0}', space=vmem, size = 0x18000, scoped, tag = 'input window, operand 1, single buffered']
    #allocation6 [shape = 's32[1]{0}', space=sflag, size = 0x4, scoped, tag = 'scoped memory for tpu_custom_call.1']
    #allocation7 [shape = 'u8[98304]{0}', space=vmem, size = 0x18000, scoped, tag = 'input window, operand 3, single buffered']
    #allocation8 [shape = 'u8[1536]{0}', space=vmem, size = 0x800, scoped, tag = 'output window, operand 0, single buffered']
    %10 = vsyncpa [#allocation3], 0
    %11 = vsyncpa [#allocation6], 0
    %12 = vsyncpa [#allocation4], 0
    // Predicated region
    $region2: #{tpu_custom_call.1} parent=1 // pred_check
      _
    $region3: #{tpu_custom_call.1} parent=1 // pred_check_branch
      %14 = sbr.rel (0) target = $region5
    $region4: #{tpu_custom_call.1} parent=1 // pred_region
      %s16 = ssub.s32 48, 48
      %17 = vsyncadd [#allocation3], %s16
      %s19 = sshll.u32 [#allocation2], 4
      %s20 = int_to_ptr.vmem [resolvable:$true] %s19
      %22 = dma.hbm_to_vmem [thread:$0]  %s0, 48, %s20, [#allocation3]
    $region5: #{tpu_custom_call.1} parent=1 // pred_fallthru
      _
    // Predicated region
    $region6: #{tpu_custom_call.1} parent=1 // pred_check
      _
    $region7: #{tpu_custom_call.1} parent=1 // pred_check_branch
      %24 = sbr.rel (0) target = $region9
    $region8: #{tpu_custom_call.1} parent=1 // pred_region
      %s26 = ssub.s32 3072, 3072
      %27 = vsyncadd [#allocation6], %s26
      %s28 = sshll.u32 [#allocation5], 4
      %s29 = int_to_ptr.vmem [resolvable:$true] %s28
      %34 = dma.hbm_to_vmem [thread:$0]  %s1, 3072, %s29, [#allocation6], 64, 64, 4
    $region9: #{tpu_custom_call.1} parent=1 // pred_fallthru
      _
    // Predicated region
    $region10: #{tpu_custom_call.1} parent=1 // pred_check
      _
    $region11: #{tpu_custom_call.1} parent=1 // pred_check_branch
      %36 = sbr.rel (0) target = $region13
    $region12: #{tpu_custom_call.1} parent=1 // pred_region
      _
    $region13: #{tpu_custom_call.1} parent=1 // pred_fallthru
      _
    // Predicated region
    $region14: #{tpu_custom_call.1} parent=1 // pred_check
      _
    $region15: #{tpu_custom_call.1} parent=1 // pred_check_branch
      %38 = sbr.rel (0) target = $region17
    $region16: #{tpu_custom_call.1} parent=1 // pred_region
      %s40 = ssub.s32 3072, 3072
      %41 = vsyncadd [#allocation6], %s40
      %s42 = sshll.u32 [#allocation7], 4
      %s43 = int_to_ptr.vmem [resolvable:$true] %s42
      %48 = dma.hbm_to_vmem [thread:$0]  %s3, 3072, %s43, [#allocation6], 192, 192, 12
    $region17: #{tpu_custom_call.1} parent=1 // pred_fallthru
      _
    // Predicated region
    $region18: #{tpu_custom_call.1} parent=1 // pred_check
      _
    $region19: #{tpu_custom_call.1} parent=1 // pred_check_branch
      %50 = sbr.rel (0) target = $region21
    $region20: #{tpu_custom_call.1} parent=1 // pred_region
      _
    $region21: #{tpu_custom_call.1} parent=1 // pred_fallthru
      _
    // Predicated region
    $region22: #{tpu_custom_call.1} parent=1 // pred_check
      _
    $region23: #{tpu_custom_call.1} parent=1 // pred_check_branch
      %52 = sbr.rel (0) target = $region25
    $region24: #{tpu_custom_call.1} parent=1 // pred_region
      %53 = dma.done [#allocation3], 48
    $region25: #{tpu_custom_call.1} parent=1 // pred_fallthru
      _
    // Predicated region
    $region26: #{tpu_custom_call.1} parent=1 // pred_check
      _
    $region27: #{tpu_custom_call.1} parent=1 // pred_check_branch
      %55 = sbr.rel (0) target = $region29
    $region28: #{tpu_custom_call.1} parent=1 // pred_region
      %56 = dma.done [#allocation6], 3072
    $region29: #{tpu_custom_call.1} parent=1 // pred_fallthru
      _
    // Predicated region
    $region30: #{tpu_custom_call.1} parent=1 // pred_check
      _
    $region31: #{tpu_custom_call.1} parent=1 // pred_check_branch
      %58 = sbr.rel (0) target = $region33
    $region32: #{tpu_custom_call.1} parent=1 // pred_region
      %59 = dma.done [#allocation6], 3072
    $region33: #{tpu_custom_call.1} parent=1 // pred_fallthru
      _
    %v61 = vld [vmem:[#allocation2] sm:$0x7]
    %v62 = vld [vmem:[#allocation5] sm:$0xf]
    %v63 = vld [vmem:[#allocation5 + $0x4] sm:$0xf]
    %v64 = vld [vmem:[#allocation5 + $0x8] sm:$0xf]
    %v65 = vld [vmem:[#allocation5 + $0xc] sm:$0xf]
    %v66 = vld [vmem:[#allocation5 + $0x10] sm:$0xf]
    %v67 = vld [vmem:[#allocation5 + $0x14] sm:$0xf]
    %v68 = vld [vmem:[#allocation5 + $0x18] sm:$0xf]
    %v69 = vld [vmem:[#allocation5 + $0x1c] sm:$0xf]
    %v70 = vld [vmem:[#allocation5 + $0x20] sm:$0xf]
    %v71 = vld [vmem:[#allocation5 + $0x24] sm:$0xf]
    %v72 = vld [vmem:[#allocation5 + $0x28] sm:$0xf]
    %v73 = vld [vmem:[#allocation5 + $0x2c] sm:$0xf]
    %v74 = vld [vmem:[#allocation5 + $0x30] sm:$0xf]
    %v75 = vld [vmem:[#allocation5 + $0x34] sm:$0xf]
    %v76 = vld [vmem:[#allocation5 + $0x38] sm:$0xf]
    %v77 = vld [vmem:[#allocation5 + $0x3c] sm:$0xf]
    %v78 = vld [vmem:[#allocation5 + $0x40] sm:$0xf]
    %v79 = vld [vmem:[#allocation5 + $0x44] sm:$0xf]
    %v80 = vld [vmem:[#allocation5 + $0x48] sm:$0xf]
    %v81 = vld [vmem:[#allocation5 + $0x4c] sm:$0xf]
    %v82 = vld [vmem:[#allocation5 + $0x50] sm:$0xf]
    %v83 = vld [vmem:[#allocation5 + $0x54] sm:$0xf]
    %v84 = vld [vmem:[#allocation5 + $0x58] sm:$0xf]
    %v85 = vld [vmem:[#allocation5 + $0x5c] sm:$0xf]
    %v86 = vld [vmem:[#allocation5 + $0x60] sm:$0xf]
    %v87 = vld [vmem:[#allocation5 + $0x64] sm:$0xf]
    %v88 = vld [vmem:[#allocation5 + $0x68] sm:$0xf]
    %v89 = vld [vmem:[#allocation5 + $0x6c] sm:$0xf]
    %v90 = vld [vmem:[#allocation5 + $0x70] sm:$0xf]
    %v91 = vld [vmem:[#allocation5 + $0x74] sm:$0xf]
    %v92 = vld [vmem:[#allocation5 + $0x78] sm:$0xf]
    %v93 = vld [vmem:[#allocation5 + $0x7c] sm:$0xf]
    %v94 = vld [vmem:[#allocation5 + $0x80] sm:$0xf]
    %v95 = vld [vmem:[#allocation5 + $0x84] sm:$0xf]
    %v96 = vld [vmem:[#allocation5 + $0x88] sm:$0xf]
    %v97 = vld [vmem:[#allocation5 + $0x8c] sm:$0xf]
    %v98 = vld [vmem:[#allocation5 + $0x90] sm:$0xf]
    %v99 = vld [vmem:[#allocation5 + $0x94] sm:$0xf]
    %v100 = vld [vmem:[#allocation5 + $0x98] sm:$0xf]
    %v101 = vld [vmem:[#allocation5 + $0x9c] sm:$0xf]
    %v102 = vld [vmem:[#allocation5 + $0xa0] sm:$0xf]
    %v103 = vld [vmem:[#allocation5 + $0xa4] sm:$0xf]
    %v104 = vld [vmem:[#allocation5 + $0xa8] sm:$0xf]
    %v105 = vld [vmem:[#allocation5 + $0xac] sm:$0xf]
    %v106 = vld [vmem:[#allocation5 + $0xb0] sm:$0xf]
    %v107 = vld [vmem:[#allocation5 + $0xb4] sm:$0xf]
    %v108 = vld [vmem:[#allocation5 + $0xb8] sm:$0xf]
    %v109 = vld [vmem:[#allocation5 + $0xbc] sm:$0xf]
    %v110 = vld [vmem:[%s2] sm:$0x1]
    %v113 = vunpack.c.l.s4 1966171168
    %v114 = vunpack.c.0.s8 %v113
    %v115 = vlaneseq
    %v116 = vshrl.u32 %v115, 7
    %v117 = vsub.s32 %v114, %v116
    %v118 = vrot.slane %v61, %v117
    %v119 = vcombine.high %v118, %v118
    %v121 = vunpack.c.l.s4 1966171168
    %v122 = vunpack.c.0.s8 %v121
    %v123 = vlaneseq
    %v124 = vshrl.u32 %v123, 7
    %v125 = vsub.s32 %v122, %v124
    %v126 = vrot.slane %v118, %v125
    %v128 = vunpack.c.l.s4 1966171168
    %v129 = vunpack.c.0.s8 %v128
    %v130 = vlaneseq
    %v131 = vshrl.u32 %v130, 7
    %v132 = vsub.s32 %v129, %v131
    %v133 = vrot.slane %v119, %v132
    %v134 = vcombine.high %v126, %v126
    %v186 = vunpack.c.l.b16 %v62
    %v187 = vunpack.c.l.b16 %v63
    %v188 = vunpack.c.l.b16 %v64
    %v189 = vunpack.c.l.b16 %v65
    %v190 = vunpack.c.l.b16 %v66
    %v191 = vunpack.c.l.b16 %v67
    %v192 = vunpack.c.l.b16 %v68
    %v193 = vunpack.c.l.b16 %v69
    %v194 = vunpack.c.l.b16 %v70
    %v195 = vunpack.c.l.b16 %v71
    %v196 = vunpack.c.l.b16 %v72
    %v197 = vunpack.c.l.b16 %v73
    %v198 = vunpack.c.l.b16 %v74
    %v199 = vunpack.c.l.b16 %v75
    %v200 = vunpack.c.l.b16 %v76
    %v201 = vunpack.c.l.b16 %v77
    %v202 = vunpack.c.l.b16 %v78
    %v203 = vunpack.c.l.b16 %v79
    %v204 = vunpack.c.l.b16 %v80
    %v205 = vunpack.c.l.b16 %v81
    %v206 = vunpack.c.l.b16 %v82
    %v207 = vunpack.c.l.b16 %v83
    %v208 = vunpack.c.l.b16 %v84
    %v209 = vunpack.c.l.b16 %v85
    %v210 = vunpack.c.l.b16 %v86
    %v211 = vunpack.c.l.b16 %v87
    %v212 = vunpack.c.l.b16 %v88
    %v213 = vunpack.c.l.b16 %v89
    %v214 = vunpack.c.l.b16 %v90
    %v215 = vunpack.c.l.b16 %v91
    %v216 = vunpack.c.l.b16 %v92
    %v217 = vunpack.c.l.b16 %v93
    %v218 = vunpack.c.l.b16 %v94
    %v219 = vunpack.c.l.b16 %v95
    %v220 = vunpack.c.l.b16 %v96
    %v221 = vunpack.c.l.b16 %v97
    %v222 = vunpack.c.l.b16 %v98
    %v223 = vunpack.c.l.b16 %v99
    %v224 = vunpack.c.l.b16 %v100
    %v225 = vunpack.c.l.b16 %v101
    %v226 = vunpack.c.l.b16 %v102
    %v227 = vunpack.c.l.b16 %v103
    %v228 = vunpack.c.l.b16 %v104
    %v229 = vunpack.c.l.b16 %v105
    %v230 = vunpack.c.l.b16 %v106
    %v231 = vunpack.c.l.b16 %v107
    %v232 = vunpack.c.l.b16 %v108
    %v233 = vunpack.c.l.b16 %v109
    %v234 = vpack.c.b16 %v187, %v186
    %v235 = vpack.c.b16 %v189, %v188
    %v236 = vpack.c.b16 %v191, %v190
    %v237 = vpack.c.b16 %v193, %v192
    %v238 = vpack.c.b16 %v195, %v194
    %v239 = vpack.c.b16 %v197, %v196
    %v240 = vpack.c.b16 %v199, %v198
    %v241 = vpack.c.b16 %v201, %v200
    %v242 = vpack.c.b16 %v203, %v202
    %v243 = vpack.c.b16 %v205, %v204
    %v244 = vpack.c.b16 %v207, %v206
    %v245 = vpack.c.b16 %v209, %v208
    %v246 = vpack.c.b16 %v211, %v210
    %v247 = vpack.c.b16 %v213, %v212
    %v248 = vpack.c.b16 %v215, %v214
    %v249 = vpack.c.b16 %v217, %v216
    %v250 = vpack.c.b16 %v219, %v218
    %v251 = vpack.c.b16 %v221, %v220
    %v252 = vpack.c.b16 %v223, %v222
    %v253 = vpack.c.b16 %v225, %v224
    %v254 = vpack.c.b16 %v227, %v226
    %v255 = vpack.c.b16 %v229, %v228
    %v256 = vpack.c.b16 %v231, %v230
    %v257 = vpack.c.b16 %v233, %v232
    %282 = vmatprep.subr.bf16.mxu0 0
    %283 = vmatpush1.bf16.msra.mxu0 %v241
    %284 = vmatprep.subr.bf16.mxu0 0
    %285 = vmatpush1.bf16.msra.mxu0 %v240
    %286 = vmatprep.subr.bf16.mxu0 0
    %287 = vmatpush1.bf16.msra.mxu0 %v239
    %288 = vmatprep.subr.bf16.mxu0 0
    %289 = vmatpush1.bf16.msra.mxu0 %v238
    %290 = vmatprep.subr.bf16.mxu0 0
    %291 = vmatpush1.bf16.msra.mxu0 %v237
    %292 = vmatprep.subr.bf16.mxu0 0
    %293 = vmatpush1.bf16.msra.mxu0 %v236
    %294 = vmatprep.subr.bf16.mxu0 0
    %295 = vmatpush1.bf16.msra.mxu0 %v235
    %296 = vmatprep.subr.bf16.mxu0 0
    %297 = vmatpush1.bf16.msra.mxu0 %v234
    %298 = vmatprep.subr.bf16.mxu0 0
    %299 = vmatpush2.bf16.msra.mxu0 %v249
    %300 = vmatprep.subr.bf16.mxu0 0
    %301 = vmatpush2.bf16.msra.mxu0 %v248
    %302 = vmatprep.subr.bf16.mxu0 0
    %303 = vmatpush2.bf16.msra.mxu0 %v247
    %304 = vmatprep.subr.bf16.mxu0 0
    %305 = vmatpush2.bf16.msra.mxu0 %v246
    %306 = vmatprep.subr.bf16.mxu0 0
    %307 = vmatpush2.bf16.msra.mxu0 %v245
    %308 = vmatprep.subr.bf16.mxu0 0
    %309 = vmatpush2.bf16.msra.mxu0 %v244
    %310 = vmatprep.subr.bf16.mxu0 0
    %311 = vmatpush2.bf16.msra.mxu0 %v243
    %312 = vmatprep.subr.bf16.mxu0 0
    %313 = vmatpush2.bf16.msra.mxu0 %v242
    %314 = vmatprep.mubr.bf16.mxu0 %v133
    %315 = vmatmul.mubr.bf16.gmra.mxu0 %v126
    %v316 = vpop.f32.mrf.mxu0
    %v317 = vadd.f32 %v110, %v316
    %v318 = vpop.f32.mrf.mxu0
    %v319 = vpop.f32.mrf.mxu0
    %v320 = vpop.f32.mrf.mxu0
    %321 = vdwg.mxu0
    %322 = vmatprep.subr.bf16.mxu0 0
    %323 = vmatpush1.bf16.msra.mxu0 %v257
    %324 = vmatprep.subr.bf16.mxu0 0
    %325 = vmatpush1.bf16.msra.mxu0 %v256
    %326 = vmatprep.subr.bf16.mxu0 0
    %327 = vmatpush1.bf16.msra.mxu0 %v255
    %328 = vmatprep.subr.bf16.mxu0 0
    %329 = vmatpush1.bf16.msra.mxu0 %v254
    %330 = vmatprep.subr.bf16.mxu0 0
    %331 = vmatpush1.bf16.msra.mxu0 %v253
    %332 = vmatprep.subr.bf16.mxu0 0
    %333 = vmatpush1.bf16.msra.mxu0 %v252
    %334 = vmatprep.subr.bf16.mxu0 0
    %335 = vmatpush1.bf16.msra.mxu0 %v251
    %336 = vmatprep.subr.bf16.mxu0 0
    %337 = vmatpush1.bf16.msra.mxu0 %v250
    %338 = vmatprep.subr.bf16.mxu0 0
    %339 = vmatpush2.bf16.msra.mxu0 0
    %340 = vmatprep.subr.bf16.mxu0 0
    %341 = vmatpush2.bf16.msra.mxu0 0
    %342 = vmatprep.subr.bf16.mxu0 0
    %343 = vmatpush2.bf16.msra.mxu0 0
    %344 = vmatprep.subr.bf16.mxu0 0
    %345 = vmatpush2.bf16.msra.mxu0 0
    %346 = vmatprep.subr.bf16.mxu0 0
    %347 = vmatpush2.bf16.msra.mxu0 0
    %348 = vmatprep.subr.bf16.mxu0 0
    %349 = vmatpush2.bf16.msra.mxu0 0
    %350 = vmatprep.subr.bf16.mxu0 0
    %351 = vmatpush2.bf16.msra.mxu0 0
    %352 = vmatprep.subr.bf16.mxu0 0
    %353 = vmatpush2.bf16.msra.mxu0 0
    %354 = vmatprep.mubr.bf16.mxu0 0
    %355 = vmatmul.mubr.bf16.gmra.mxu0 %v134
    %v356 = vpop.f32.mrf.mxu0
    %v357 = vadd.f32 %v317, %v356
    %v358 = vpop.f32.mrf.mxu0
    %v359 = vpop.f32.mrf.mxu0
    %v360 = vpop.f32.mrf.mxu0
    %361 = vdwg.mxu0
    %v362 = vmax.f32 %v357, 0.0
    %v363 = vpack.c.bf16 %v362, %v362
    %v364 = vld [vmem:[#allocation7] sm:$0xff]
    %v365 = vld [vmem:[#allocation7 + $0x8] sm:$0xf]
    %v366 = vld [vmem:[#allocation7 + $0xc] sm:$0xff]
    %v367 = vld [vmem:[#allocation7 + $0x14] sm:$0xf]
    %v368 = vld [vmem:[#allocation7 + $0x18] sm:$0xff]
    %v369 = vld [vmem:[#allocation7 + $0x20] sm:$0xf]
    %v370 = vld [vmem:[#allocation7 + $0x24] sm:$0xff]
    %v371 = vld [vmem:[#allocation7 + $0x2c] sm:$0xf]
    %v372 = vld [vmem:[#allocation7 + $0x30] sm:$0xff]
    %v373 = vld [vmem:[#allocation7 + $0x38] sm:$0xf]
    %v374 = vld [vmem:[#allocation7 + $0x3c] sm:$0xff]
    %v375 = vld [vmem:[#allocation7 + $0x44] sm:$0xf]
    %v376 = vld [vmem:[#allocation7 + $0x48] sm:$0xff]
    %v377 = vld [vmem:[#allocation7 + $0x50] sm:$0xf]
    %v378 = vld [vmem:[#allocation7 + $0x54] sm:$0xff]
    %v379 = vld [vmem:[#allocation7 + $0x5c] sm:$0xf]
    %v380 = vld [vmem:[#allocation7 + $0x60] sm:$0xff]
    %v381 = vld [vmem:[#allocation7 + $0x68] sm:$0xf]
    %v382 = vld [vmem:[#allocation7 + $0x6c] sm:$0xff]
    %v383 = vld [vmem:[#allocation7 + $0x74] sm:$0xf]
    %v384 = vld [vmem:[#allocation7 + $0x78] sm:$0xff]
    %v385 = vld [vmem:[#allocation7 + $0x80] sm:$0xf]
    %v386 = vld [vmem:[#allocation7 + $0x84] sm:$0xff]
    %v387 = vld [vmem:[#allocation7 + $0x8c] sm:$0xf]
    %v388 = vld [vmem:[#allocation7 + $0x90] sm:$0xff]
    %v389 = vld [vmem:[#allocation7 + $0x98] sm:$0xf]
    %v390 = vld [vmem:[#allocation7 + $0x9c] sm:$0xff]
    %v391 = vld [vmem:[#allocation7 + $0xa4] sm:$0xf]
    %v392 = vld [vmem:[#allocation7 + $0xa8] sm:$0xff]
    %v393 = vld [vmem:[#allocation7 + $0xb0] sm:$0xf]
    %v394 = vld [vmem:[#allocation7 + $0xb4] sm:$0xff]
    %v395 = vld [vmem:[#allocation7 + $0xbc] sm:$0xf]
    %v396 = vld [vmem:[%s4] sm:$0x7]
    %v429 = vunpack.c.l.b16 %v364
    %v430 = vunpack.c.h.b16 %v364
    %v431 = vunpack.c.l.b16 %v365
    %v432 = vunpack.c.l.b16 %v366
    %v433 = vunpack.c.h.b16 %v366
    %v434 = vunpack.c.l.b16 %v367
    %v435 = vunpack.c.l.b16 %v368
    %v436 = vunpack.c.h.b16 %v368
    %v437 = vunpack.c.l.b16 %v369
    %v438 = vunpack.c.l.b16 %v370
    %v439 = vunpack.c.h.b16 %v370
    %v440 = vunpack.c.l.b16 %v371
    %v441 = vunpack.c.l.b16 %v372
    %v442 = vunpack.c.h.b16 %v372
    %v443 = vunpack.c.l.b16 %v373
    %v444 = vunpack.c.l.b16 %v374
    %v445 = vunpack.c.h.b16 %v374
    %v446 = vunpack.c.l.b16 %v375
    %v447 = vunpack.c.l.b16 %v376
    %v448 = vunpack.c.h.b16 %v376
    %v449 = vunpack.c.l.b16 %v377
    %v450 = vunpack.c.l.b16 %v378
    %v451 = vunpack.c.h.b16 %v378
    %v452 = vunpack.c.l.b16 %v379
    %v453 = vunpack.c.l.b16 %v380
    %v454 = vunpack.c.h.b16 %v380
    %v455 = vunpack.c.l.b16 %v381
    %v456 = vunpack.c.l.b16 %v382
    %v457 = vunpack.c.h.b16 %v382
    %v458 = vunpack.c.l.b16 %v383
    %v459 = vunpack.c.l.b16 %v384
    %v460 = vunpack.c.h.b16 %v384
    %v461 = vunpack.c.l.b16 %v385
    %v462 = vunpack.c.l.b16 %v386
    %v463 = vunpack.c.h.b16 %v386
    %v464 = vunpack.c.l.b16 %v387
    %v465 = vunpack.c.l.b16 %v388
    %v466 = vunpack.c.h.b16 %v388
    %v467 = vunpack.c.l.b16 %v389
    %v468 = vunpack.c.l.b16 %v390
    %v469 = vunpack.c.h.b16 %v390
    %v470 = vunpack.c.l.b16 %v391
    %v471 = vunpack.c.l.b16 %v392
    %v472 = vunpack.c.h.b16 %v392
    %v473 = vunpack.c.l.b16 %v393
    %v474 = vunpack.c.l.b16 %v394
    %v475 = vunpack.c.h.b16 %v394
    %v476 = vunpack.c.l.b16 %v395
    %v477 = vpack.c.b16 %v432, %v429
    %v478 = vpack.c.b16 %v433, %v430
    %v479 = vpack.c.b16 %v434, %v431
    %v480 = vpack.c.b16 %v438, %v435
    %v481 = vpack.c.b16 %v439, %v436
    %v482 = vpack.c.b16 %v440, %v437
    %v483 = vpack.c.b16 %v444, %v441
    %v484 = vpack.c.b16 %v445, %v442
    %v485 = vpack.c.b16 %v446, %v443
    %v486 = vpack.c.b16 %v450, %v447
    %v487 = vpack.c.b16 %v451, %v448
    %v488 = vpack.c.b16 %v452, %v449
    %v489 = vpack.c.b16 %v456, %v453
    %v490 = vpack.c.b16 %v457, %v454
    %v491 = vpack.c.b16 %v458, %v455
    %v492 = vpack.c.b16 %v462, %v459
    %v493 = vpack.c.b16 %v463, %v460
    %v494 = vpack.c.b16 %v464, %v461
    %v495 = vpack.c.b16 %v468, %v465
    %v496 = vpack.c.b16 %v469, %v466
    %v497 = vpack.c.b16 %v470, %v467
    %v498 = vpack.c.b16 %v474, %v471
    %v499 = vpack.c.b16 %v475, %v472
    %v500 = vpack.c.b16 %v476, %v473
    %v526 = vlaneseq
    %v527 = vshrl.u32 %v526, 7
    %v528 = vsub.s32 0, %v527
    %v529 = vrot.slane %v396, %v528
    %v530 = vlaneseq
    %v531 = vshrl.u32 %v530, 7
    %v532 = vsub.s32 1, %v531
    %v533 = vrot.slane %v396, %v532
    %v534 = vlaneseq
    %v535 = vshrl.u32 %v534, 7
    %v536 = vsub.s32 2, %v535
    %v537 = vrot.slane %v396, %v536
    %541 = vmatprep.subr.bf16.mxu0 %v499
    %542 = vmatpush1.bf16.msra.mxu0 %v498
    %543 = vmatprep.subr.bf16.mxu0 %v496
    %544 = vmatpush1.bf16.msra.mxu0 %v495
    %545 = vmatprep.subr.bf16.mxu0 %v493
    %546 = vmatpush1.bf16.msra.mxu0 %v492
    %547 = vmatprep.subr.bf16.mxu0 %v490
    %548 = vmatpush1.bf16.msra.mxu0 %v489
    %549 = vmatprep.subr.bf16.mxu0 %v487
    %550 = vmatpush1.bf16.msra.mxu0 %v486
    %551 = vmatprep.subr.bf16.mxu0 %v484
    %552 = vmatpush1.bf16.msra.mxu0 %v483
    %553 = vmatprep.subr.bf16.mxu0 %v481
    %554 = vmatpush1.bf16.msra.mxu0 %v480
    %555 = vmatprep.subr.bf16.mxu0 %v478
    %556 = vmatpush1.bf16.msra.mxu0 %v477
    %557 = vmatprep.subr.bf16.mxu0 0
    %558 = vmatpush2.bf16.msra.mxu0 0
    %559 = vmatprep.subr.bf16.mxu0 0
    %560 = vmatpush2.bf16.msra.mxu0 0
    %561 = vmatprep.subr.bf16.mxu0 0
    %562 = vmatpush2.bf16.msra.mxu0 0
    %563 = vmatprep.subr.bf16.mxu0 0
    %564 = vmatpush2.bf16.msra.mxu0 0
    %565 = vmatprep.subr.bf16.mxu0 0
    %566 = vmatpush2.bf16.msra.mxu0 0
    %567 = vmatprep.subr.bf16.mxu0 0
    %568 = vmatpush2.bf16.msra.mxu0 0
    %569 = vmatprep.subr.bf16.mxu0 0
    %570 = vmatpush2.bf16.msra.mxu0 0
    %571 = vmatprep.subr.bf16.mxu0 0
    %572 = vmatpush2.bf16.msra.mxu0 0
    %573 = vmatprep.mubr.bf16.mxu0 0
    %574 = vmatmul.mubr.bf16.gmra.mxu0 %v363
    %v575 = vpop.f32.mrf.mxu0
    %v576 = vadd.f32 %v529, %v575
    %v577 = vpop.f32.mrf.mxu0
    %v578 = vadd.f32 %v533, %v577
    %v579 = vpop.f32.mrf.mxu0
    %v580 = vpop.f32.mrf.mxu0
    %581 = vdwg.mxu0
    %582 = vmatprep.subr.bf16.mxu0 0
    %583 = vmatpush1.bf16.msra.mxu0 %v500
    %584 = vmatprep.subr.bf16.mxu0 0
    %585 = vmatpush1.bf16.msra.mxu0 %v497
    %586 = vmatprep.subr.bf16.mxu0 0
    %587 = vmatpush1.bf16.msra.mxu0 %v494
    %588 = vmatprep.subr.bf16.mxu0 0
    %589 = vmatpush1.bf16.msra.mxu0 %v491
    %590 = vmatprep.subr.bf16.mxu0 0
    %591 = vmatpush1.bf16.msra.mxu0 %v488
    %592 = vmatprep.subr.bf16.mxu0 0
    %593 = vmatpush1.bf16.msra.mxu0 %v485
    %594 = vmatprep.subr.bf16.mxu0 0
    %595 = vmatpush1.bf16.msra.mxu0 %v482
    %596 = vmatprep.subr.bf16.mxu0 0
    %597 = vmatpush1.bf16.msra.mxu0 %v479
    %598 = vmatprep.subr.bf16.mxu0 0
    %599 = vmatpush2.bf16.msra.mxu0 0
    %600 = vmatprep.subr.bf16.mxu0 0
    %601 = vmatpush2.bf16.msra.mxu0 0
    %602 = vmatprep.subr.bf16.mxu0 0
    %603 = vmatpush2.bf16.msra.mxu0 0
    %604 = vmatprep.subr.bf16.mxu0 0
    %605 = vmatpush2.bf16.msra.mxu0 0
    %606 = vmatprep.subr.bf16.mxu0 0
    %607 = vmatpush2.bf16.msra.mxu0 0
    %608 = vmatprep.subr.bf16.mxu0 0
    %609 = vmatpush2.bf16.msra.mxu0 0
    %610 = vmatprep.subr.bf16.mxu0 0
    %611 = vmatpush2.bf16.msra.mxu0 0
    %612 = vmatprep.subr.bf16.mxu0 0
    %613 = vmatpush2.bf16.msra.mxu0 0
    %614 = vmatprep.mubr.bf16.mxu0 0
    %615 = vmatmul.mubr.bf16.gmra.mxu0 %v363
    %v616 = vpop.f32.mrf.mxu0
    %v617 = vadd.f32 %v537, %v616
    %v618 = vpop.f32.mrf.mxu0
    %v619 = vpop.f32.mrf.mxu0
    %v620 = vpop.f32.mrf.mxu0
    %621 = vdwg.mxu0
    %v622 = vxor.u32 %v576, 2147483648
    %v623 = vxor.u32 %v578, 2147483648
    %v624 = vxor.u32 %v617, 2147483648
    %v625 = vmul.f32 %v622, 1.442695
    %v626 = vpow.pop %v625
    %v627 = vmul.f32 %v623, 1.442695
    %v628 = vpow.pop %v627
    %v629 = vmul.f32 %v624, 1.442695
    %v630 = vpow.pop %v629
    %v631 = vadd.f32 %v626, 1.0
    %v632 = vadd.f32 %v628, 1.0
    %v633 = vadd.f32 %v630, 1.0
    %v634 = vrcp.pop %v631
    %v635 = vmul.f32 1.0, %v634
    %v636 = vrcp.pop %v632
    %v637 = vmul.f32 1.0, %v636
    %v638 = vrcp.pop %v633
    %v639 = vmul.f32 1.0, %v638
    %v640 = vpack.c.bf16 %v635, %v635
    %v641 = vpack.c.bf16 %v637, %v637
    %v642 = vpack.c.bf16 %v639, %v639
    %v646 = vcombine.low %v640, %v641
    %v648 = vunpack.c.l.s4 1966171168
    %v649 = vunpack.c.0.s8 %v648
    %v650 = vlaneseq
    %v651 = vshrl.u32 %v650, 7
    %v652 = vsub.s32 %v649, %v651
    %v653 = vrot.slane %v646, %v652
    %v655 = vunpack.c.l.s4 1966171168
    %v656 = vunpack.c.0.s8 %v655
    %v657 = vlaneseq
    %v658 = vshrl.u32 %v657, 7
    %v659 = vsub.s32 %v656, %v658
    %v660 = vrot.slane %v642, %v659
    %v661 = vcombine.low %v653, %v660
    %v663 = vunpack.c.l.s4 1966171168
    %v664 = vunpack.c.0.s8 %v663
    %v665 = vlaneseq
    %v666 = vshrl.u32 %v665, 7
    %v667 = vsub.s32 %v664, %v666
    %v668 = vrot.slane %v661, %v667
    %vm670 = vcmask 1040384
    %vm671 = vsmask.f32 256
    %vm672 = vmand %vm670, %vm671
    %vm673 = vcmask 1041409
    %vm674 = vsmask.f32 1280
    %vm675 = vmand %vm673, %vm674
    %vm676 = vmor %vm675, %vm672
    %vm677 = vcmask 1042434
    %vm678 = vsmask.f32 2304
    %vm679 = vmand %vm677, %vm678
    %vm680 = vmor %vm679, %vm676
    %v681 = vld [vmem:[#allocation8] sm:$0x7]
    %v682 = vsel %vm680, %v668, %v681
    %683 = vst [vmem:[#allocation8] sm:$0x7] %v682
    // Predicated region
    $region34: #{tpu_custom_call.1} parent=1 // pred_check
      _
    $region35: #{tpu_custom_call.1} parent=1 // pred_check_branch
      %685 = sbr.rel (0) target = $region37
    $region36: #{tpu_custom_call.1} parent=1 // pred_region
      %s687 = ssub.s32 48, 48
      %688 = vsyncadd [#allocation4], %s687
      %s690 = sshll.u32 [#allocation8], 4
      %s691 = int_to_ptr.vmem [resolvable:$true] %s690
      %693 = dma.vmem_to_hbm [thread:$0]  %s691, 48, %s5, [#allocation4]
    $region37: #{tpu_custom_call.1} parent=1 // pred_fallthru
      _
    // Predicated region
    $region38: #{tpu_custom_call.1} parent=1 // pred_check
      _
    $region39: #{tpu_custom_call.1} parent=1 // pred_check_branch
      %695 = sbr.rel (0) target = $region41
    $region40: #{tpu_custom_call.1} parent=1 // pred_region
      %696 = dma.done [#allocation4], 48
    $region41: #{tpu_custom_call.1} parent=1 // pred_fallthru
      _
    %697 = vsyncpa [#allocation3], 1
    %698 = vsyncpa [#allocation6], 1
    %699 = vsyncpa [#allocation4], 1

</llo_original>
